<compile_context>
chip_gen: v6e
topology: v6e:2x2x1
jax: 0.10.0
libtpu: 0.0.40
codegen_flags: <defaults>
</compile_context>

<pallas_src>
import math

import jax
import jax.numpy as jnp
import numpy as np
from jax import lax
from jax.experimental import pallas as pl
from jax.experimental.pallas import tpu as pltpu

# ----------------------------- small "ArcticConfig" -----------------------------
HIDDEN = 32          # config.hidden_size
NUM_EXPERTS = 8      # config.num_local_experts
TOP_K = 2            # config.num_experts_per_tok

_MAX_TOKEN_TILE = 4096   # lane-aligned token tile cap (multiple of 128)


# --------------------------------- fused kernel ---------------------------------
def _moe_router_kernel(x_ref, gate_w_ref, mask_ref):
    """x_ref: (Tt, H) f32, gate_w_ref: (E, H) f32.

    mask_ref: (E, TOP_K, Tt) int32 -- one-hot expert mask, T on the lane axis
              (exactly one_hot(selected, E).permute(2, 1, 0) for this token tile).
    """
    x = x_ref[...]          # (Tt, H)
    gw = gate_w_ref[...]    # (E, H)

    # Router logits, expert-major: logits[e, t] = sum_h gate_w[e, h] * x[t, h].
    # Softmax is intentionally omitted: it is monotone per token column, so the
    # top-k indices (the only thing this module returns) are unchanged.
    logits = lax.dot_general(
        gw, x, (((1,), (1,)), ((), ())), preferred_element_type=jnp.float32
    )  # (E, Tt)

    E, Tt = logits.shape
    e_iota = lax.broadcasted_iota(jnp.int32, (E, Tt), 0)

    # Iterative top-k (static unroll over TOP_K); ties break toward the lowest index.
    cur = logits
    for j in range(TOP_K):
        mj = jnp.max(cur, axis=0, keepdims=True)                            # (1, Tt)
        is_max = cur == mj
        idx = jnp.min(jnp.where(is_max, e_iota, E), axis=0, keepdims=True)  # (1, Tt)
        sel = e_iota == idx                                                 # (E, Tt) one-hot
        mask_ref[:, j, :] = sel.astype(mask_ref.dtype)
        cur = jnp.where(sel, -jnp.inf, cur)


# ----------------------------------- wrapper -----------------------------------
def sync_arctic_moe_block(hidden_states, gate_w):
    """hidden_states: (B, S, H) f32; gate_w: (E, H) f32.

    Returns (final_hidden_states (B*S, H), expert_mask (E, top_k, B*S)).
    """
    B, S, H = hidden_states.shape
    T = B * S
    E = gate_w.shape[0]
    x2d = hidden_states.reshape(T, H)

    # Token tile: whole thing if small, else a 128-aligned tile capped for VMEM.
    Tt = T if T <= _MAX_TOKEN_TILE else _MAX_TOKEN_TILE
    grid = (pl.cdiv(T, Tt),)

    expert_mask = pl.pallas_call(
        _moe_router_kernel,
        out_shape=jax.ShapeDtypeStruct((E, TOP_K, T), jnp.int32),
        grid=grid,
        in_specs=[
            pl.BlockSpec((Tt, H), lambda i: (i, 0)),   # x: marched along tokens
            pl.BlockSpec((E, H), lambda i: (0, 0)),    # gate_w: VMEM-resident
        ],
        out_specs=pl.BlockSpec((E, TOP_K, Tt), lambda i: (0, 0, i)),
        compiler_params=pltpu.CompilerParams(
            dimension_semantics=("parallel",),
        ),
    )(x2d, gate_w)

    # Experts are never evaluated by this module's forward: final output is all zeros.
    # Produced by XLA (broadcast-zero), not by the kernel, to avoid pointless HBM traffic.
    final = jnp.zeros((T, H), dtype=hidden_states.dtype)
    return final, expert_mask


# ------------------------------ pure-JAX reference ------------------------------
def reference(hidden_states, gate_w):
    B, S, H = hidden_states.shape
    x2d = hidden_states.reshape(B * S, H).astype(jnp.float32)
    logits = x2d @ gate_w.astype(jnp.float32).T
    w = jax.nn.softmax(logits, axis=-1)
    _, sel = lax.top_k(w, TOP_K)                                # (T, K)
    final = jnp.zeros((B * S, H), dtype=hidden_states.dtype)
    mask = jax.nn.one_hot(sel, NUM_EXPERTS, dtype=jnp.int32)    # (T, K, E)
    return final, jnp.transpose(mask, (2, 1, 0))                # (E, K, T)


# ------------------------------------ main ------------------------------------
if __name__ == "__main__":
    B, S = 2, 8
    key = jax.random.PRNGKey(0)
    kx, kg = jax.random.split(key)

    hidden_states = jax.random.normal(kx, (B, S, HIDDEN), dtype=jnp.float32)
    bound = 1.0 / math.sqrt(HIDDEN)                 # nn.Linear default init range
    gate_w = jax.random.uniform(kg, (NUM_EXPERTS, HIDDEN), jnp.float32, -bound, bound)

    final, expert_mask = sync_arctic_moe_block(hidden_states, gate_w)
    final = jax.block_until_ready(final)
    expert_mask = jax.block_until_ready(expert_mask)

    ref_final, ref_mask = reference(hidden_states, gate_w)
    np.testing.assert_allclose(np.asarray(final), np.asarray(ref_final), atol=0, rtol=0)
    np.testing.assert_array_equal(np.asarray(expert_mask), np.asarray(ref_mask))

    print("KERNEL_OK")
</pallas_src>

<mosaic_0001>
module attributes {stable_mosaic.version = 11 : i64} {
  func.func @_moe_router_kernel(%arg0: i32, %arg1: memref<16x32xf32, #tpu.memory_space<vmem>>, %arg2: memref<8x32xf32, #tpu.memory_space<vmem>>, %arg3: memref<8x2x16xi32, #tpu.memory_space<vmem>>) attributes {dimension_semantics = [#tpu.dimension_semantics<parallel>], iteration_bounds = array<i64: 1>, scalar_prefetch = 0 : i64, scratch_operands = 0 : i64, tpu.core_type = #tpu.core_type<tc>, window_params = [{transform_indices = @transform_0, window_bounds = array<i64: 16, 32>}, {pipeline_mode = #tpu.pipeline_mode<synchronous>, transform_indices = @transform_1, window_bounds = array<i64: 8, 32>}, {transform_indices = @transform_2, window_bounds = array<i64: 8, 2, 16>}]} {
    %c0 = arith.constant 0 : index
    %c0_0 = arith.constant 0 : index
    %0 = vector.load %arg1[%c0, %c0_0] : memref<16x32xf32, #tpu.memory_space<vmem>>, vector<16x32xf32>
    %c0_1 = arith.constant 0 : index
    %c0_2 = arith.constant 0 : index
    %1 = vector.load %arg2[%c0_1, %c0_2] : memref<8x32xf32, #tpu.memory_space<vmem>>, vector<8x32xf32>
    %cst = arith.constant dense<0.000000e+00> : vector<8x16xf32>
    %2 = tpu.matmul %1, %0, %cst {dimension_numbers = #tpu.dot_dimension_numbers<[1], [1], [0], [0], [0, 0, 1, 0], [], []>} : vector<8x32xf32>, vector<16x32xf32>, vector<8x16xf32> -> vector<8x16xf32>
    %3 = tpu.iota {dimensions = array<i32: 0>} : vector<8x16xi32>
    %cst_3 = arith.constant dense<0xFF800000> : vector<16xf32>
    %4 = vector.multi_reduction <maximumf>, %2, %cst_3 [0] : vector<8x16xf32> to vector<16xf32>
    %5 = vector.shape_cast %4 : vector<16xf32> to vector<1x16xf32>
    %6 = vector.broadcast %5 : vector<1x16xf32> to vector<8x16xf32>
    %7 = arith.cmpf oeq, %2, %6 : vector<8x16xf32>
    %c8_i32 = arith.constant 8 : i32
    %8 = vector.broadcast %c8_i32 : i32 to vector<8x16xi32>
    %9 = arith.select %7, %3, %8 : vector<8x16xi1>, vector<8x16xi32>
    %cst_4 = arith.constant dense<2147483647> : vector<16xi32>
    %10 = vector.multi_reduction <minsi>, %9, %cst_4 [0] : vector<8x16xi32> to vector<16xi32>
    %11 = vector.shape_cast %10 : vector<16xi32> to vector<1x16xi32>
    %12 = vector.broadcast %11 : vector<1x16xi32> to vector<8x16xi32>
    %13 = arith.cmpi eq, %3, %12 : vector<8x16xi32>
    %14 = arith.extui %13 : vector<8x16xi1> to vector<8x16xi32>
    %c0_5 = arith.constant 0 : index
    %c0_6 = arith.constant 0 : index
    %c0_7 = arith.constant 0 : index
    %15 = vector.load %arg3[%c0_5, %c0_6, %c0_7] : memref<8x2x16xi32, #tpu.memory_space<vmem>>, vector<8x1x16xi32>
    %16 = vector.shape_cast %15 : vector<8x1x16xi32> to vector<8x16xi32>
    %17 = vector.shape_cast %14 : vector<8x16xi32> to vector<8x1x16xi32>
    tpu.vector_store %arg3[%c0_5, %c0_6, %c0_7], %17 {strides = array<i32>} : memref<8x2x16xi32, #tpu.memory_space<vmem>>, vector<8x1x16xi32>,
    %cst_8 = arith.constant 0xFF800000 : f32
    %18 = vector.broadcast %cst_8 : f32 to vector<8x16xf32>
    %19 = arith.select %13, %18, %2 : vector<8x16xi1>, vector<8x16xf32>
    %cst_9 = arith.constant dense<0xFF800000> : vector<16xf32>
    %20 = vector.multi_reduction <maximumf>, %19, %cst_9 [0] : vector<8x16xf32> to vector<16xf32>
    %21 = vector.shape_cast %20 : vector<16xf32> to vector<1x16xf32>
    %22 = vector.broadcast %21 : vector<1x16xf32> to vector<8x16xf32>
    %23 = arith.cmpf oeq, %19, %22 : vector<8x16xf32>
    %c8_i32_10 = arith.constant 8 : i32
    %24 = vector.broadcast %c8_i32_10 : i32 to vector<8x16xi32>
    %25 = arith.select %23, %3, %24 : vector<8x16xi1>, vector<8x16xi32>
    %cst_11 = arith.constant dense<2147483647> : vector<16xi32>
    %26 = vector.multi_reduction <minsi>, %25, %cst_11 [0] : vector<8x16xi32> to vector<16xi32>
    %27 = vector.shape_cast %26 : vector<16xi32> to vector<1x16xi32>
    %28 = vector.broadcast %27 : vector<1x16xi32> to vector<8x16xi32>
    %29 = arith.cmpi eq, %3, %28 : vector<8x16xi32>
    %30 = arith.extui %29 : vector<8x16xi1> to vector<8x16xi32>
    %c0_12 = arith.constant 0 : index
    %c1 = arith.constant 1 : index
    %c0_13 = arith.constant 0 : index
    %31 = vector.load %arg3[%c0_12, %c1, %c0_13] : memref<8x2x16xi32, #tpu.memory_space<vmem>>, vector<8x1x16xi32>
    %32 = vector.shape_cast %31 : vector<8x1x16xi32> to vector<8x16xi32>
    %33 = vector.shape_cast %30 : vector<8x16xi32> to vector<8x1x16xi32>
    tpu.vector_store %arg3[%c0_12, %c1, %c0_13], %33 {strides = array<i32>} : memref<8x2x16xi32, #tpu.memory_space<vmem>>, vector<8x1x16xi32>,
    return
  }
  func.func @transform_0(%arg0: i32) -> (i32, i32) {
    %c0_i32 = arith.constant 0 : i32
    %c0_i32_0 = arith.constant 0 : i32
    return %arg0, %c0_i32 : i32, i32
  }
  func.func @transform_1(%arg0: i32) -> (i32, i32) {
    %c0_i32 = arith.constant 0 : i32
    %c0_i32_0 = arith.constant 0 : i32
    %c0_i32_1 = arith.constant 0 : i32
    return %c0_i32, %c0_i32_0 : i32, i32
  }
  func.func @transform_2(%arg0: i32) -> (i32, i32, i32) {
    %c0_i32 = arith.constant 0 : i32
    %c0_i32_0 = arith.constant 0 : i32
    %c0_i32_1 = arith.constant 0 : i32
    return %c0_i32, %c0_i32_0, %arg0 : i32, i32, i32
  }
}

</mosaic_0001>

<llo_original>
// kernel: tpu_custom_call.1
$region0: #{tpu_custom_call.1}
  #allocation0 [shape = 'u32[]', space=smem, size = 0x4, offset = 0x4, fixed_abs, tag = 'smem constant byte address 0x4 - core index']
  #allocation1 [shape = 'u32[144,128]{1,0:T(1,128)}', space=vmem, size = 0x12000, scoped, tag = 'internal scratch']
  %s0 = inlined_call_operand.hbm [shape: f32[16,32], index: 0, kind: input, shape index: {}]
  %s1 = inlined_call_operand.hbm [shape: f32[8,32], index: 1, kind: input, shape index: {}]
  %s2 = inlined_call_operand.hbm [shape: s32[8,2,16], index: 2, kind: output, shape index: {}]
  %s3 = sld [smem:[#allocation0]]
  $region26: #{tpu_custom_call.1} parent=0
    _
  %s5 = ssub.s32 1, %s3
  %s6 = scalar_select 0, %s5, %s3
  $region1: #{tpu_custom_call.1} parent=0
    #allocation2 [shape = 'u8[8192]{0}', space=vmem, size = 0x2000, scoped, tag = 'input window, operand 0, single buffered']
    #allocation3 [shape = 's32[1]{0}', space=sflag, size = 0x4, scoped, tag = 'scoped memory for tpu_custom_call.1']
    #allocation4 [shape = 's32[1]{0}', space=sflag, size = 0x4, scoped, tag = 'scoped memory for tpu_custom_call.1']
    #allocation5 [shape = 'u8[4096]{0}', space=vmem, size = 0x1000, scoped, tag = 'input window, operand 1, single buffered']
    #allocation6 [shape = 's32[1]{0}', space=sflag, size = 0x4, scoped, tag = 'scoped memory for tpu_custom_call.1']
    #allocation7 [shape = 'u8[8192]{0}', space=vmem, size = 0x2000, scoped, tag = 'output window, operand 0, single buffered']
    %7 = vsyncpa [#allocation3], 0
    %8 = vsyncpa [#allocation6], 0
    %9 = vsyncpa [#allocation4], 0
    // Predicated region
    $region2: #{tpu_custom_call.1} parent=1 // pred_check
      _
    $region3: #{tpu_custom_call.1} parent=1 // pred_check_branch
      %11 = sbr.rel (0) target = $region5
    $region4: #{tpu_custom_call.1} parent=1 // pred_region
      %s13 = ssub.s32 256, 256
      %14 = vsyncadd [#allocation3], %s13
      %s15 = sshll.u32 [#allocation2], 4
      %s16 = int_to_ptr.vmem [resolvable:$true] %s15
      %21 = dma.hbm_to_vmem [thread:$0]  %s0, 256, %s16, [#allocation3], 128, 128, 8
    $region5: #{tpu_custom_call.1} parent=1 // pred_fallthru
      _
    // Predicated region
    $region6: #{tpu_custom_call.1} parent=1 // pred_check
      _
    $region7: #{tpu_custom_call.1} parent=1 // pred_check_branch
      %23 = sbr.rel (0) target = $region9
    $region8: #{tpu_custom_call.1} parent=1 // pred_region
      %s25 = ssub.s32 128, 128
      %26 = vsyncadd [#allocation6], %s25
      %s28 = sshll.u32 [#allocation5], 4
      %s29 = int_to_ptr.vmem [resolvable:$true] %s28
      %31 = dma.hbm_to_vmem [thread:$0]  %s1, 128, %s29, [#allocation6]
    $region9: #{tpu_custom_call.1} parent=1 // pred_fallthru
      _
    // Predicated region
    $region10: #{tpu_custom_call.1} parent=1 // pred_check
      _
    $region11: #{tpu_custom_call.1} parent=1 // pred_check_branch
      %33 = sbr.rel (0) target = $region13
    $region12: #{tpu_custom_call.1} parent=1 // pred_region
      %34 = dma.done [#allocation3], 256
    $region13: #{tpu_custom_call.1} parent=1 // pred_fallthru
      _
    // Predicated region
    $region14: #{tpu_custom_call.1} parent=1 // pred_check
      _
    $region15: #{tpu_custom_call.1} parent=1 // pred_check_branch
      %36 = sbr.rel (0) target = $region17
    $region16: #{tpu_custom_call.1} parent=1 // pred_region
      %37 = dma.done [#allocation6], 128
    $region17: #{tpu_custom_call.1} parent=1 // pred_fallthru
      _
    %v38 = vld [vmem:[#allocation2] sm:$0xff]
    %v39 = vld [vmem:[#allocation2 + $0x8] sm:$0xff]
    %v40 = vld [vmem:[#allocation5] sm:$0xff]
    %vm41 = vcmask 261120
    %v43 = vsel %vm41, %v40, 0
    %v46 = vsel %vm41, %v38, 0
    %v49 = vsel %vm41, %v39, 0
    %51 = vmatprep.subr.mxu0 0.0
    %52 = vmatpush1.xpose.msra.mxu0 0.0
    %53 = vmatprep.subr.mxu0 0.0
    %54 = vmatpush1.xpose.msra.mxu0 0.0
    %55 = vmatprep.subr.mxu0 0.0
    %56 = vmatpush1.xpose.msra.mxu0 0.0
    %57 = vmatprep.subr.mxu0 0.0
    %58 = vmatpush1.xpose.msra.mxu0 0.0
    %59 = vmatprep.subr.mxu0 0.0
    %60 = vmatpush1.xpose.msra.mxu0 0.0
    %61 = vmatprep.subr.mxu0 0.0
    %62 = vmatpush1.xpose.msra.mxu0 0.0
    %63 = vmatprep.subr.mxu0 0.0
    %64 = vmatpush1.xpose.msra.mxu0 0.0
    %65 = vmatprep.subr.mxu0 0.0
    %66 = vmatpush1.xpose.msra.mxu0 0.0
    %67 = vmatprep.subr.mxu0 0.0
    %68 = vmatpush1.xpose.msra.mxu0 0.0
    %69 = vmatprep.subr.mxu0 0.0
    %70 = vmatpush1.xpose.msra.mxu0 0.0
    %71 = vmatprep.subr.mxu0 0.0
    %72 = vmatpush1.xpose.msra.mxu0 0.0
    %73 = vmatprep.subr.mxu0 0.0
    %74 = vmatpush1.xpose.msra.mxu0 0.0
    %75 = vmatprep.subr.mxu0 0.0
    %76 = vmatpush1.xpose.msra.mxu0 0.0
    %77 = vmatprep.subr.mxu0 0.0
    %78 = vmatpush1.xpose.msra.mxu0 0.0
    %79 = vmatprep.subr.mxu0 0.0
    %80 = vmatpush1.xpose.msra.mxu0 %v49
    %81 = vmatprep.subr.mxu0 0.0
    %82 = vmatpush1.xpose.msra.mxu0 %v46
    %83 = vmatprep.subr.mxu0 0.0
    %84 = vmatpush2.xpose.msra.mxu0 0.0
    %85 = vmatprep.subr.mxu0 0.0
    %86 = vmatpush2.xpose.msra.mxu0 0.0
    %87 = vmatprep.subr.mxu0 0.0
    %88 = vmatpush2.xpose.msra.mxu0 0.0
    %89 = vmatprep.subr.mxu0 0.0
    %90 = vmatpush2.xpose.msra.mxu0 0.0
    %91 = vmatprep.subr.mxu0 0.0
    %92 = vmatpush2.xpose.msra.mxu0 0.0
    %93 = vmatprep.subr.mxu0 0.0
    %94 = vmatpush2.xpose.msra.mxu0 0.0
    %95 = vmatprep.subr.mxu0 0.0
    %96 = vmatpush2.xpose.msra.mxu0 0.0
    %97 = vmatprep.subr.mxu0 0.0
    %98 = vmatpush2.xpose.msra.mxu0 0.0
    %99 = vmatprep.subr.mxu0 0.0
    %100 = vmatpush2.xpose.msra.mxu0 0.0
    %101 = vmatprep.subr.mxu0 0.0
    %102 = vmatpush2.xpose.msra.mxu0 0.0
    %103 = vmatprep.subr.mxu0 0.0
    %104 = vmatpush2.xpose.msra.mxu0 0.0
    %105 = vmatprep.subr.mxu0 0.0
    %106 = vmatpush2.xpose.msra.mxu0 0.0
    %107 = vmatprep.subr.mxu0 0.0
    %108 = vmatpush2.xpose.msra.mxu0 0.0
    %109 = vmatprep.subr.mxu0 0.0
    %110 = vmatpush2.xpose.msra.mxu0 0.0
    %111 = vmatprep.subr.mxu0 0.0
    %112 = vmatpush2.xpose.msra.mxu0 0.0
    %113 = vmatprep.subr.mxu0 0.0
    %114 = vmatpush2.xpose.msra.mxu0 0.0
    %115 = vmatprep.mubr.f32.mxu0 0.0
    %116 = vmatmul.mubr.f32.gmra.mxu0 %v43
    %v117 = vpop.f32.mrf.mxu0
    %v118 = vadd.f32 0.0, %v117
    %v119 = vpop.f32.mrf.mxu0
    %120 = vdwg.mxu0
    %v121 = vlaneseq
    %v122 = vshrl.u32 %v121, 7
    %vm123 = vcmask 130048
    %v124 = vsel %vm123, %v118, -inf
    %v125 = vrot.slane %v124, 4
    %v126 = vmax.f32 %v124, %v125
    %v127 = vrot.slane %v126, 2
    %v128 = vmax.f32 %v126, %v127
    %v129 = vrot.slane %v128, 1
    %v130 = vmax.f32 %v128, %v129
    %vm131 = vcmp.eq.f32.partialorder %v118, %v130
    %v132 = vsel %vm131, %v122, 8
    %v133 = vsel %vm123, %v132, 2147483647
    %v134 = vrot.slane %v133, 4
    %vm135 = vcmp.lt.s32.totalorder %v133, %v134
    %v136 = vsel %vm135, %v133, %v134
    %v137 = vrot.slane %v136, 2
    %vm138 = vcmp.lt.s32.totalorder %v136, %v137
    %v139 = vsel %vm138, %v136, %v137
    %v140 = vrot.slane %v139, 1
    %vm141 = vcmp.lt.s32.totalorder %v139, %v140
    %v142 = vsel %vm141, %v139, %v140
    %vm143 = vcmp.eq.s32.totalorder %v122, %v142
    %v144 = vsel %vm143, 1, 0
    %v145 = vcombine.high %v144, %v144
    %v147 = vunpack.c.l.s4 1966171168
    %v148 = vunpack.c.0.s8 %v147
    %v149 = vlaneseq
    %v150 = vshrl.u32 %v149, 7
    %v151 = vsub.s32 %v148, %v150
    %v152 = vrot.slane %v144, %v151
    %v154 = vunpack.c.l.s4 1966171168
    %v155 = vunpack.c.0.s8 %v154
    %v156 = vlaneseq
    %v157 = vshrl.u32 %v156, 7
    %v158 = vsub.s32 %v155, %v157
    %v159 = vrot.slane %v145, %v158
    %v160 = vcombine.high %v152, %v152
    %v161 = vcombine.high %v159, %v159
    %v163 = vunpack.c.l.s4 1966171168
    %v164 = vunpack.c.0.s8 %v163
    %v165 = vlaneseq
    %v166 = vshrl.u32 %v165, 7
    %v167 = vsub.s32 %v164, %v166
    %v168 = vrot.slane %v152, %v167
    %v170 = vunpack.c.l.s4 1966171168
    %v171 = vunpack.c.0.s8 %v170
    %v172 = vlaneseq
    %v173 = vshrl.u32 %v172, 7
    %v174 = vsub.s32 %v171, %v173
    %v175 = vrot.slane %v159, %v174
    %v177 = vunpack.c.l.s4 1966171168
    %v178 = vunpack.c.0.s8 %v177
    %v179 = vlaneseq
    %v180 = vshrl.u32 %v179, 7
    %v181 = vsub.s32 %v178, %v180
    %v182 = vrot.slane %v160, %v181
    %v184 = vunpack.c.l.s4 1966171168
    %v185 = vunpack.c.0.s8 %v184
    %v186 = vlaneseq
    %v187 = vshrl.u32 %v186, 7
    %v188 = vsub.s32 %v185, %v187
    %v189 = vrot.slane %v161, %v188
    %v190 = vcombine.high %v168, %v168
    %v191 = vcombine.high %v175, %v175
    %v192 = vcombine.high %v182, %v182
    %v193 = vcombine.high %v189, %v189
    %vm194 = vcmask 122880
    %195 = vst.msk [vmem:[#allocation7] sm:$0x1] %vm194, %v168
    %196 = vst.msk [vmem:[#allocation7 + $0x2] sm:$0x1] %vm194, %v182
    %197 = vst.msk [vmem:[#allocation7 + $0x4] sm:$0x1] %vm194, %v190
    %198 = vst.msk [vmem:[#allocation7 + $0x6] sm:$0x1] %vm194, %v192
    %199 = vst.msk [vmem:[#allocation7 + $0x8] sm:$0x1] %vm194, %v175
    %200 = vst.msk [vmem:[#allocation7 + $0xa] sm:$0x1] %vm194, %v189
    %201 = vst.msk [vmem:[#allocation7 + $0xc] sm:$0x1] %vm194, %v191
    %202 = vst.msk [vmem:[#allocation7 + $0xe] sm:$0x1] %vm194, %v193
    %v203 = vsel %vm143, -inf, %v118
    %v204 = vsel %vm123, %v203, -inf
    %v205 = vrot.slane %v204, 4
    %v206 = vmax.f32 %v204, %v205
    %v207 = vrot.slane %v206, 2
    %v208 = vmax.f32 %v206, %v207
    %v209 = vrot.slane %v208, 1
    %v210 = vmax.f32 %v208, %v209
    %vm211 = vcmp.eq.f32.partialorder %v203, %v210
    %v212 = vsel %vm211, %v122, 8
    %v213 = vsel %vm123, %v212, 2147483647
    %v214 = vrot.slane %v213, 4
    %vm215 = vcmp.lt.s32.totalorder %v213, %v214
    %v216 = vsel %vm215, %v213, %v214
    %v217 = vrot.slane %v216, 2
    %vm218 = vcmp.lt.s32.totalorder %v216, %v217
    %v219 = vsel %vm218, %v216, %v217
    %v220 = vrot.slane %v219, 1
    %vm221 = vcmp.lt.s32.totalorder %v219, %v220
    %v222 = vsel %vm221, %v219, %v220
    %vm223 = vcmp.eq.s32.totalorder %v122, %v222
    %v224 = vsel %vm223, 1, 0
    %v225 = vcombine.high %v224, %v224
    %v227 = vunpack.c.l.s4 1966171168
    %v228 = vunpack.c.0.s8 %v227
    %v229 = vlaneseq
    %v230 = vshrl.u32 %v229, 7
    %v231 = vsub.s32 %v228, %v230
    %v232 = vrot.slane %v224, %v231
    %v234 = vunpack.c.l.s4 1966171168
    %v235 = vunpack.c.0.s8 %v234
    %v236 = vlaneseq
    %v237 = vshrl.u32 %v236, 7
    %v238 = vsub.s32 %v235, %v237
    %v239 = vrot.slane %v225, %v238
    %v240 = vcombine.high %v232, %v232
    %v241 = vcombine.high %v239, %v239
    %v243 = vunpack.c.l.s4 1966171168
    %v244 = vunpack.c.0.s8 %v243
    %v245 = vlaneseq
    %v246 = vshrl.u32 %v245, 7
    %v247 = vsub.s32 %v244, %v246
    %v248 = vrot.slane %v232, %v247
    %v250 = vunpack.c.l.s4 1966171168
    %v251 = vunpack.c.0.s8 %v250
    %v252 = vlaneseq
    %v253 = vshrl.u32 %v252, 7
    %v254 = vsub.s32 %v251, %v253
    %v255 = vrot.slane %v239, %v254
    %v257 = vunpack.c.l.s4 1966171168
    %v258 = vunpack.c.0.s8 %v257
    %v259 = vlaneseq
    %v260 = vshrl.u32 %v259, 7
    %v261 = vsub.s32 %v258, %v260
    %v262 = vrot.slane %v240, %v261
    %v264 = vunpack.c.l.s4 1966171168
    %v265 = vunpack.c.0.s8 %v264
    %v266 = vlaneseq
    %v267 = vshrl.u32 %v266, 7
    %v268 = vsub.s32 %v265, %v267
    %v269 = vrot.slane %v241, %v268
    %v270 = vcombine.high %v248, %v248
    %v271 = vcombine.high %v255, %v255
    %v272 = vcombine.high %v262, %v262
    %v273 = vcombine.high %v269, %v269
    %274 = vst.msk [vmem:[#allocation7 + $0x1] sm:$0x1] %vm194, %v248
    %275 = vst.msk [vmem:[#allocation7 + $0x3] sm:$0x1] %vm194, %v262
    %276 = vst.msk [vmem:[#allocation7 + $0x5] sm:$0x1] %vm194, %v270
    %277 = vst.msk [vmem:[#allocation7 + $0x7] sm:$0x1] %vm194, %v272
    %278 = vst.msk [vmem:[#allocation7 + $0x9] sm:$0x1] %vm194, %v255
    %279 = vst.msk [vmem:[#allocation7 + $0xb] sm:$0x1] %vm194, %v269
    %280 = vst.msk [vmem:[#allocation7 + $0xd] sm:$0x1] %vm194, %v271
    %281 = vst.msk [vmem:[#allocation7 + $0xf] sm:$0x1] %vm194, %v273
    // Predicated region
    $region18: #{tpu_custom_call.1} parent=1 // pred_check
      _
    $region19: #{tpu_custom_call.1} parent=1 // pred_check_branch
      %283 = sbr.rel (0) target = $region21
    $region20: #{tpu_custom_call.1} parent=1 // pred_region
      %s285 = ssub.s32 256, 256
      %286 = vsyncadd [#allocation4], %s285
      %s287 = sshll.u32 [#allocation7], 4
      %s288 = int_to_ptr.vmem [resolvable:$true] %s287
      %293 = dma.vmem_to_hbm [thread:$0]  %s288, 256, %s2, [#allocation4], 32, 32, 2
    $region21: #{tpu_custom_call.1} parent=1 // pred_fallthru
      _
    // Predicated region
    $region22: #{tpu_custom_call.1} parent=1 // pred_check
      _
    $region23: #{tpu_custom_call.1} parent=1 // pred_check_branch
      %295 = sbr.rel (0) target = $region25
    $region24: #{tpu_custom_call.1} parent=1 // pred_region
      %296 = dma.done [#allocation4], 256
    $region25: #{tpu_custom_call.1} parent=1 // pred_fallthru
      _
    %297 = vsyncpa [#allocation3], 1
    %298 = vsyncpa [#allocation6], 1
    %299 = vsyncpa [#allocation4], 1

</llo_original>
